<compile_context>
chip_gen: v6e
topology: v6e:2x2x1
jax: 0.10.0
libtpu: 0.0.40
codegen_flags: <defaults>
</compile_context>

<pallas_src>
import functools

import jax
import jax.numpy as jnp
from jax.experimental import pallas as pl
from jax.experimental.pallas import tpu as pltpu


def _layernorm_kernel(x_ref, wb_ref, o_ref, *, eps: float, inv_n: float):
    # x_ref: (TB, N) block of flattened samples; wb_ref: (2, N) resident slab
    # (row 0 = weight broadcast to N, row 1 = bias broadcast to N).
    x = x_ref[...].astype(jnp.float32)                           # (TB, N)
    s = jnp.sum(x, axis=1, keepdims=True)                        # (TB, 1)
    sq = jnp.sum(x * x, axis=1, keepdims=True)                   # (TB, 1)
    mean = s * inv_n
    var = jnp.maximum(sq * inv_n - mean * mean, 0.0)             # clamp for stability
    inv_std = jax.lax.rsqrt(var + eps)                           # (TB, 1)
    w = wb_ref[0:1, :].astype(jnp.float32)                       # (1, N)
    b = wb_ref[1:2, :].astype(jnp.float32)                       # (1, N)
    a = w * inv_std                                              # (TB, N) fused scale
    o_ref[...] = ((x - mean) * a + b).astype(o_ref.dtype)


@functools.lru_cache(maxsize=None)
def _hw_params():
    """Return (vmem_budget_bytes, num_tensorcores_per_device), best effort."""
    vmem_cap = None
    num_cores = 1
    try:
        info = pltpu.get_tpu_info()
        cap = int(getattr(info, "vmem_capacity_bytes", 0))
        vmem_cap = cap if cap > 0 else None
    except Exception:
        vmem_cap = None
    kind = ""
    try:
        d = jax.devices()[0]
        kind = str(getattr(d, "device_kind", "")).lower()
        nc = getattr(d, "num_cores", None)
        if nc:
            num_cores = int(nc)
    except Exception:
        pass
    if num_cores <= 1 and any(t in kind for t in ("v4", "v5p", "v7")):
        num_cores = 2  # megacore / dual-TC chips
    if vmem_cap is None:
        vmem_cap = 64 * 1024 * 1024 if "v7" in kind else 128 * 1024 * 1024
    if vmem_cap <= 64 * 1024 * 1024:
        budget = 40 * 1024 * 1024   # v7x-class: leave double-buffer headroom
    else:
        budget = 96 * 1024 * 1024   # v5e / v6e: 128 MiB physical
    return budget, num_cores


def _round_up8(v: int) -> int:
    return -(-v // 8) * 8


def _choose_block_b(B: int, N: int, itemsize: int, budget: int, num_cores: int) -> int:
    # Resident affine slab: (2, N) block, sublane-padded to 8 rows, f32,
    # double-buffered by the pipeline -> ~2 * 8 * N * 4 bytes (constant term).
    const_bytes = 2 * 8 * N * 4
    # Per row of the batch tile: double-buffered input + output tiles plus
    # ~3 live f32 working arrays inside the kernel (x_f32, x*x, epilogue).
    bytes_per_row = 4 * N * itemsize + 3 * N * 4
    avail = max(budget - const_bytes, 0)
    max_tb = (avail // max(bytes_per_row, 1)) // 8 * 8
    if max_tb < 8:
        # TODO(synk): fall back to a split-N reduction here for huge C*H*W.
        max_tb = 8
    tb = max_tb
    if num_cores >= 2 and B >= 16:
        # Prefer >= num_cores grid steps so the 'parallel' batch axis can be
        # split across TensorCores (v7x / megacore chips only).
        tb = min(tb, _round_up8(-(-B // num_cores)))
    # Never larger than the (8-rounded) batch: bigger tiles are pure padding.
    tb = min(tb, _round_up8(B))
    if B < 8:
        # A block equal to the full (small) batch dim is allowed.
        tb = B
    return max(tb, 1)


@functools.partial(jax.jit, static_argnames=("eps",))
def layer_norm(x, weight, bias, eps: float = 1e-5):
    """x: (B, C, H, W). weight/bias: (C,). Returns (B, C, H, W)."""
    B, C, H, W = x.shape
    HW = H * W
    N = C * HW

    x2 = x.reshape(B, N)
    # Pack per-channel affine into a single flattened, lane-dense (2, N) slab.
    w2 = jnp.broadcast_to(weight[:, None], (C, HW)).reshape(N)
    b2 = jnp.broadcast_to(bias[:, None], (C, HW)).reshape(N)
    wb = jnp.stack([w2, b2], axis=0)  # (2, N)

    itemsize = jnp.dtype(x.dtype).itemsize
    budget, num_cores = _hw_params()
    block_b = _choose_block_b(B, N, itemsize, budget, num_cores)
    num_blocks = pl.cdiv(B, block_b)

    kernel = functools.partial(_layernorm_kernel, eps=float(eps), inv_n=1.0 / N)

    cost = pl.CostEstimate(
        flops=6 * B * N,
        transcendentals=B,
        bytes_accessed=int(2 * B * N * itemsize + 2 * N * jnp.dtype(wb.dtype).itemsize),
    )

    out2 = pl.pallas_call(
        kernel,
        out_shape=jax.ShapeDtypeStruct((B, N), x.dtype),
        grid_spec=pltpu.PrefetchScalarGridSpec(
            num_scalar_prefetch=0,
            grid=(num_blocks,),
            in_specs=[
                pl.BlockSpec((block_b, N), lambda i: (i, 0)),
                pl.BlockSpec((2, N), lambda i: (0, 0)),   # resident weight+bias slab
            ],
            out_specs=pl.BlockSpec((block_b, N), lambda i: (i, 0)),
        ),
        compiler_params=pltpu.CompilerParams(
            dimension_semantics=("parallel",),
            vmem_limit_bytes=budget,
        ),
        cost_estimate=cost,
    )(x2, wb)

    return out2.reshape(B, C, H, W)


def _reference(x, weight, bias, eps):
    mean = jnp.mean(x, axis=(1, 2, 3), keepdims=True)
    var = jnp.mean((x - mean) ** 2, axis=(1, 2, 3), keepdims=True)
    norm = (x - mean) / jnp.sqrt(var + eps)
    return weight[None, :, None, None] * norm + bias[None, :, None, None]


if __name__ == "__main__":
    key = jax.random.PRNGKey(0)
    k_x, k_w, k_b = jax.random.split(key, 3)

    B, C, H, W = 2, 4, 16, 16
    x = jax.random.normal(k_x, (B, C, H, W), dtype=jnp.float32)

    # Parameters as in reset_parameters(): ones / zeros.
    weight = jnp.ones((C,), dtype=jnp.float32)
    bias = jnp.zeros((C,), dtype=jnp.float32)

    out = layer_norm(x, weight, bias, eps=1e-5)
    out = jax.block_until_ready(out)
    ref = _reference(x, weight, bias, 1e-5)
    assert out.shape == (B, C, H, W)
    assert jnp.allclose(out, ref, atol=1e-4, rtol=1e-4)

    # Also exercise a non-trivial affine to validate the fused epilogue.
    weight2 = jax.random.normal(k_w, (C,), dtype=jnp.float32)
    bias2 = jax.random.normal(k_b, (C,), dtype=jnp.float32)
    out2 = jax.block_until_ready(layer_norm(x, weight2, bias2, eps=1e-5))
    ref2 = _reference(x, weight2, bias2, 1e-5)
    assert jnp.allclose(out2, ref2, atol=1e-4, rtol=1e-4)

    print("KERNEL_OK")
</pallas_src>

<mosaic_0001>
module attributes {stable_mosaic.version = 11 : i64} {
  func.func @_layernorm_kernel(%arg0: i32, %arg1: memref<2x1024xf32, #tpu.memory_space<vmem>>, %arg2: memref<2x1024xf32, #tpu.memory_space<vmem>>, %arg3: memref<2x1024xf32, #tpu.memory_space<vmem>>) attributes {dimension_semantics = [#tpu.dimension_semantics<parallel>], iteration_bounds = array<i64: 1>, scalar_prefetch = 0 : i64, scratch_operands = 0 : i64, tpu.core_type = #tpu.core_type<tc>, window_params = [{transform_indices = @transform_0, window_bounds = array<i64: 2, 1024>}, {pipeline_mode = #tpu.pipeline_mode<synchronous>, transform_indices = @transform_1, window_bounds = array<i64: 2, 1024>}, {transform_indices = @transform_2, window_bounds = array<i64: 2, 1024>}]} {
    %c0 = arith.constant 0 : index
    %c0_0 = arith.constant 0 : index
    %0 = vector.load %arg1[%c0, %c0_0] : memref<2x1024xf32, #tpu.memory_space<vmem>>, vector<2x1024xf32>
    %cst = arith.constant dense<0.000000e+00> : vector<2xf32>
    %1 = vector.multi_reduction <add>, %0, %cst [1] : vector<2x1024xf32> to vector<2xf32>
    %2 = vector.shape_cast %1 : vector<2xf32> to vector<2x1xf32>
    %3 = arith.mulf %0, %0 : vector<2x1024xf32>
    %cst_1 = arith.constant dense<0.000000e+00> : vector<2xf32>
    %4 = vector.multi_reduction <add>, %3, %cst_1 [1] : vector<2x1024xf32> to vector<2xf32>
    %5 = vector.shape_cast %4 : vector<2xf32> to vector<2x1xf32>
    %cst_2 = arith.constant 9.765625E-4 : f32
    %6 = vector.broadcast %cst_2 : f32 to vector<2x1xf32>
    %7 = arith.mulf %2, %6 : vector<2x1xf32>
    %cst_3 = arith.constant 9.765625E-4 : f32
    %8 = vector.broadcast %cst_3 : f32 to vector<2x1xf32>
    %9 = arith.mulf %5, %8 : vector<2x1xf32>
    %10 = arith.mulf %7, %7 : vector<2x1xf32>
    %11 = arith.subf %9, %10 : vector<2x1xf32>
    %cst_4 = arith.constant 0.000000e+00 : f32
    %12 = vector.broadcast %cst_4 : f32 to vector<2x1xf32>
    %13 = arith.maximumf %11, %12 : vector<2x1xf32>
    %cst_5 = arith.constant 9.99999974E-6 : f32
    %14 = vector.broadcast %cst_5 : f32 to vector<2x1xf32>
    %15 = arith.addf %13, %14 : vector<2x1xf32>
    %16 = math.rsqrt %15 : vector<2x1xf32>
    %c0_6 = arith.constant 0 : index
    %c0_7 = arith.constant 0 : index
    %17 = vector.load %arg2[%c0_6, %c0_7] : memref<2x1024xf32, #tpu.memory_space<vmem>>, vector<1x1024xf32>
    %c1 = arith.constant 1 : index
    %c0_8 = arith.constant 0 : index
    %18 = vector.load %arg2[%c1, %c0_8] : memref<2x1024xf32, #tpu.memory_space<vmem>>, vector<1x1024xf32>
    %19 = vector.broadcast %17 : vector<1x1024xf32> to vector<2x1024xf32>
    %20 = vector.broadcast %16 : vector<2x1xf32> to vector<2x1024xf32>
    %21 = arith.mulf %19, %20 : vector<2x1024xf32>
    %22 = vector.broadcast %7 : vector<2x1xf32> to vector<2x1024xf32>
    %23 = arith.subf %0, %22 : vector<2x1024xf32>
    %24 = arith.mulf %23, %21 : vector<2x1024xf32>
    %25 = vector.broadcast %18 : vector<1x1024xf32> to vector<2x1024xf32>
    %26 = arith.addf %24, %25 : vector<2x1024xf32>
    %c0_9 = arith.constant 0 : index
    %c0_10 = arith.constant 0 : index
    %27 = vector.load %arg3[%c0_9, %c0_10] : memref<2x1024xf32, #tpu.memory_space<vmem>>, vector<2x1024xf32>
    tpu.vector_store %arg3[%c0_9, %c0_10], %26 {strides = array<i32>} : memref<2x1024xf32, #tpu.memory_space<vmem>>, vector<2x1024xf32>,
    return
  }
  func.func @transform_0(%arg0: i32) -> (i32, i32) {
    %c0_i32 = arith.constant 0 : i32
    %c0_i32_0 = arith.constant 0 : i32
    return %arg0, %c0_i32 : i32, i32
  }
  func.func @transform_1(%arg0: i32) -> (i32, i32) {
    %c0_i32 = arith.constant 0 : i32
    %c0_i32_0 = arith.constant 0 : i32
    %c0_i32_1 = arith.constant 0 : i32
    return %c0_i32, %c0_i32_0 : i32, i32
  }
  func.func @transform_2(%arg0: i32) -> (i32, i32) {
    %c0_i32 = arith.constant 0 : i32
    %c0_i32_0 = arith.constant 0 : i32
    return %arg0, %c0_i32 : i32, i32
  }
}

</mosaic_0001>

<llo_original>
// kernel: layer_norm.1
$region0: #{layer_norm.1}
  #allocation0 [shape = 'u32[]', space=smem, size = 0x4, offset = 0x4, fixed_abs, tag = 'smem constant byte address 0x4 - core index']
  #allocation1 [shape = 'u32[144,128]{1,0:T(1,128)}', space=vmem, size = 0x12000, scoped, tag = 'internal scratch']
  %s0 = inlined_call_operand.vmem [shape: f32[2,1024], index: 0, kind: input, shape index: {}]
  %s1 = inlined_call_operand.vmem [shape: f32[2,1024], index: 1, kind: input, shape index: {}]
  %s2 = inlined_call_operand.vmem [shape: f32[2,1024], index: 2, kind: output, shape index: {}]
  %s3 = sld [smem:[#allocation0]]
  $region18: #{layer_norm.1} parent=0
    _
  %s5 = ssub.s32 1, %s3
  %s6 = scalar_select 0, %s5, %s3
  // Predicated region
  $region2: #{layer_norm.1} parent=0 // pred_check
    _
  $region3: #{layer_norm.1} parent=0 // pred_check_branch
    %8 = sbr.rel (0) target = $region5
  $region4: #{layer_norm.1} parent=0 // pred_region
    _
  $region5: #{layer_norm.1} parent=0 // pred_fallthru
    _
  // Predicated region
  $region6: #{layer_norm.1} parent=0 // pred_check
    _
  $region7: #{layer_norm.1} parent=0 // pred_check_branch
    %10 = sbr.rel (0) target = $region9
  $region8: #{layer_norm.1} parent=0 // pred_region
    _
  $region9: #{layer_norm.1} parent=0 // pred_fallthru
    _
  %v11 = vld [vmem:[%s0] sm:$0xff]
  %v12 = vld [vmem:[%s0 + $0x8] sm:$0xff]
  %v15 = vcombine.high %v11, %v11
  %v17 = vunpack.c.l.s4 1983009808
  %v18 = vunpack.c.0.s8 %v17
  %v19 = vlaneseq
  %v20 = vshrl.u32 %v19, 7
  %v21 = vsub.s32 %v18, %v20
  %v22 = vrot.slane %v11, %v21
  %v24 = vunpack.c.l.s4 1983009808
  %v25 = vunpack.c.0.s8 %v24
  %v26 = vlaneseq
  %v27 = vshrl.u32 %v26, 7
  %v28 = vsub.s32 %v25, %v27
  %v29 = vrot.slane %v15, %v28
  %v30 = vcombine.high %v22, %v22
  %v31 = vcombine.high %v29, %v29
  %v32 = vcombine.high %v12, %v12
  %v34 = vunpack.c.l.s4 1983009808
  %v35 = vunpack.c.0.s8 %v34
  %v36 = vlaneseq
  %v37 = vshrl.u32 %v36, 7
  %v38 = vsub.s32 %v35, %v37
  %v39 = vrot.slane %v12, %v38
  %v41 = vunpack.c.l.s4 1983009808
  %v42 = vunpack.c.0.s8 %v41
  %v43 = vlaneseq
  %v44 = vshrl.u32 %v43, 7
  %v45 = vsub.s32 %v42, %v44
  %v46 = vrot.slane %v32, %v45
  %v47 = vcombine.high %v39, %v39
  %v48 = vcombine.high %v46, %v46
  %vm57 = vcmask 1041408
  %v58 = vsel %vm57, %v22, 0.0
  %v59 = vsel %vm57, %v30, 0.0
  %v60 = vadd.f32 %v58, %v59
  %v61 = vsel %vm57, %v29, 0.0
  %v62 = vadd.f32 %v60, %v61
  %v63 = vsel %vm57, %v31, 0.0
  %v64 = vadd.f32 %v62, %v63
  %v65 = vsel %vm57, %v39, 0.0
  %v66 = vadd.f32 %v64, %v65
  %v67 = vsel %vm57, %v47, 0.0
  %v68 = vadd.f32 %v66, %v67
  %v69 = vsel %vm57, %v46, 0.0
  %v70 = vadd.f32 %v68, %v69
  %v71 = vsel %vm57, %v48, 0.0
  %v72 = vadd.f32 %v70, %v71
  %73 = vadd.xlane.f32.xlu0 %v72
  %v74 = vpop.xlane.xlu0 %73
  %v75 = vmul.f32 %v11, %v11
  %v76 = vmul.f32 %v12, %v12
  %v79 = vcombine.high %v75, %v75
  %v81 = vunpack.c.l.s4 1983009808
  %v82 = vunpack.c.0.s8 %v81
  %v83 = vlaneseq
  %v84 = vshrl.u32 %v83, 7
  %v85 = vsub.s32 %v82, %v84
  %v86 = vrot.slane %v75, %v85
  %v88 = vunpack.c.l.s4 1983009808
  %v89 = vunpack.c.0.s8 %v88
  %v90 = vlaneseq
  %v91 = vshrl.u32 %v90, 7
  %v92 = vsub.s32 %v89, %v91
  %v93 = vrot.slane %v79, %v92
  %v94 = vcombine.high %v86, %v86
  %v95 = vcombine.high %v93, %v93
  %v96 = vcombine.high %v76, %v76
  %v98 = vunpack.c.l.s4 1983009808
  %v99 = vunpack.c.0.s8 %v98
  %v100 = vlaneseq
  %v101 = vshrl.u32 %v100, 7
  %v102 = vsub.s32 %v99, %v101
  %v103 = vrot.slane %v76, %v102
  %v105 = vunpack.c.l.s4 1983009808
  %v106 = vunpack.c.0.s8 %v105
  %v107 = vlaneseq
  %v108 = vshrl.u32 %v107, 7
  %v109 = vsub.s32 %v106, %v108
  %v110 = vrot.slane %v96, %v109
  %v111 = vcombine.high %v103, %v103
  %v112 = vcombine.high %v110, %v110
  %v121 = vsel %vm57, %v86, 0.0
  %v122 = vsel %vm57, %v94, 0.0
  %v123 = vadd.f32 %v121, %v122
  %v124 = vsel %vm57, %v93, 0.0
  %v125 = vadd.f32 %v123, %v124
  %v126 = vsel %vm57, %v95, 0.0
  %v127 = vadd.f32 %v125, %v126
  %v128 = vsel %vm57, %v103, 0.0
  %v129 = vadd.f32 %v127, %v128
  %v130 = vsel %vm57, %v111, 0.0
  %v131 = vadd.f32 %v129, %v130
  %v132 = vsel %vm57, %v110, 0.0
  %v133 = vadd.f32 %v131, %v132
  %v134 = vsel %vm57, %v112, 0.0
  %v135 = vadd.f32 %v133, %v134
  %136 = vadd.xlane.f32.xlu0 %v135
  %v137 = vpop.xlane.xlu0 %136
  %v138 = vmul.f32 %v74, 0.0009765625
  %v139 = vmul.f32 %v137, 0.0009765625
  %v140 = vmul.f32 %v138, %v138
  %v141 = vsub.f32 %v139, %v140
  %v142 = vmax.f32 %v141, 0.0
  %v143 = vadd.f32 %v142, 1e-05
  %v144 = vrsqrt.pop %v143
  %v145 = vld [vmem:[%s1] ss:$2 sm:$0xff]
  %s146 = scalar_lea.vmem %s1, 1
  %v147 = vld [vmem:[%s146] ss:$2 sm:$0xff]
  %v149 = vlaneseq
  %v150 = vshrl.u32 %v149, 7
  %v151 = vsub.s32 0, %v150
  %v152 = vrot.slane %v145, %v151
  %v153 = vlaneseq
  %v154 = vshrl.u32 %v153, 7
  %v155 = vsub.s32 1, %v154
  %v156 = vrot.slane %v145, %v155
  %v157 = vlaneseq
  %v158 = vshrl.u32 %v157, 7
  %v159 = vsub.s32 2, %v158
  %v160 = vrot.slane %v145, %v159
  %v161 = vlaneseq
  %v162 = vshrl.u32 %v161, 7
  %v163 = vsub.s32 3, %v162
  %v164 = vrot.slane %v145, %v163
  %v165 = vlaneseq
  %v166 = vshrl.u32 %v165, 7
  %v167 = vsub.s32 4, %v166
  %v168 = vrot.slane %v145, %v167
  %v169 = vlaneseq
  %v170 = vshrl.u32 %v169, 7
  %v171 = vsub.s32 5, %v170
  %v172 = vrot.slane %v145, %v171
  %v173 = vlaneseq
  %v174 = vshrl.u32 %v173, 7
  %v175 = vsub.s32 6, %v174
  %v176 = vrot.slane %v145, %v175
  %v177 = vlaneseq
  %v178 = vshrl.u32 %v177, 7
  %v179 = vsub.s32 7, %v178
  %v180 = vrot.slane %v145, %v179
  %v189 = vmul.f32 %v152, %v144
  %v190 = vmul.f32 %v156, %v144
  %v191 = vmul.f32 %v160, %v144
  %v192 = vmul.f32 %v164, %v144
  %v193 = vmul.f32 %v168, %v144
  %v194 = vmul.f32 %v172, %v144
  %v195 = vmul.f32 %v176, %v144
  %v196 = vmul.f32 %v180, %v144
  %v199 = vunpack.c.l.s4 269488144
  %v200 = vunpack.c.0.s8 %v199
  %v201 = vlaneseq
  %v202 = vshrl.u32 %v201, 7
  %v203 = vsub.s32 %v200, %v202
  %v204 = vrot.slane %v138, %v203
  %v206 = vsub.f32 %v11, %v204
  %v207 = vsub.f32 %v12, %v204
  %v216 = vcombine.low %v189, %v190
  %v217 = vcombine.low %v191, %v192
  %v219 = vunpack.c.l.s4 1983009808
  %v220 = vunpack.c.0.s8 %v219
  %v221 = vlaneseq
  %v222 = vshrl.u32 %v221, 7
  %v223 = vsub.s32 %v220, %v222
  %v224 = vrot.slane %v216, %v223
  %v226 = vunpack.c.l.s4 1983009808
  %v227 = vunpack.c.0.s8 %v226
  %v228 = vlaneseq
  %v229 = vshrl.u32 %v228, 7
  %v230 = vsub.s32 %v227, %v229
  %v231 = vrot.slane %v217, %v230
  %v232 = vcombine.low %v224, %v231
  %v233 = vcombine.low %v193, %v194
  %v234 = vcombine.low %v195, %v196
  %v236 = vunpack.c.l.s4 1983009808
  %v237 = vunpack.c.0.s8 %v236
  %v238 = vlaneseq
  %v239 = vshrl.u32 %v238, 7
  %v240 = vsub.s32 %v237, %v239
  %v241 = vrot.slane %v233, %v240
  %v243 = vunpack.c.l.s4 1983009808
  %v244 = vunpack.c.0.s8 %v243
  %v245 = vlaneseq
  %v246 = vshrl.u32 %v245, 7
  %v247 = vsub.s32 %v244, %v246
  %v248 = vrot.slane %v234, %v247
  %v249 = vcombine.low %v241, %v248
  %v252 = vmul.f32 %v206, %v232
  %v253 = vmul.f32 %v207, %v249
  %v255 = vlaneseq
  %v256 = vshrl.u32 %v255, 7
  %v257 = vsub.s32 0, %v256
  %v258 = vrot.slane %v147, %v257
  %v259 = vlaneseq
  %v260 = vshrl.u32 %v259, 7
  %v261 = vsub.s32 1, %v260
  %v262 = vrot.slane %v147, %v261
  %v263 = vlaneseq
  %v264 = vshrl.u32 %v263, 7
  %v265 = vsub.s32 2, %v264
  %v266 = vrot.slane %v147, %v265
  %v267 = vlaneseq
  %v268 = vshrl.u32 %v267, 7
  %v269 = vsub.s32 3, %v268
  %v270 = vrot.slane %v147, %v269
  %v271 = vlaneseq
  %v272 = vshrl.u32 %v271, 7
  %v273 = vsub.s32 4, %v272
  %v274 = vrot.slane %v147, %v273
  %v275 = vlaneseq
  %v276 = vshrl.u32 %v275, 7
  %v277 = vsub.s32 5, %v276
  %v278 = vrot.slane %v147, %v277
  %v279 = vlaneseq
  %v280 = vshrl.u32 %v279, 7
  %v281 = vsub.s32 6, %v280
  %v282 = vrot.slane %v147, %v281
  %v283 = vlaneseq
  %v284 = vshrl.u32 %v283, 7
  %v285 = vsub.s32 7, %v284
  %v286 = vrot.slane %v147, %v285
  %v287 = vcombine.low %v258, %v262
  %v288 = vcombine.low %v266, %v270
  %v290 = vunpack.c.l.s4 1983009808
  %v291 = vunpack.c.0.s8 %v290
  %v292 = vlaneseq
  %v293 = vshrl.u32 %v292, 7
  %v294 = vsub.s32 %v291, %v293
  %v295 = vrot.slane %v287, %v294
  %v297 = vunpack.c.l.s4 1983009808
  %v298 = vunpack.c.0.s8 %v297
  %v299 = vlaneseq
  %v300 = vshrl.u32 %v299, 7
  %v301 = vsub.s32 %v298, %v300
  %v302 = vrot.slane %v288, %v301
  %v303 = vcombine.low %v295, %v302
  %v304 = vcombine.low %v274, %v278
  %v305 = vcombine.low %v282, %v286
  %v307 = vunpack.c.l.s4 1983009808
  %v308 = vunpack.c.0.s8 %v307
  %v309 = vlaneseq
  %v310 = vshrl.u32 %v309, 7
  %v311 = vsub.s32 %v308, %v310
  %v312 = vrot.slane %v304, %v311
  %v314 = vunpack.c.l.s4 1983009808
  %v315 = vunpack.c.0.s8 %v314
  %v316 = vlaneseq
  %v317 = vshrl.u32 %v316, 7
  %v318 = vsub.s32 %v315, %v317
  %v319 = vrot.slane %v305, %v318
  %v320 = vcombine.low %v312, %v319
  %v323 = vadd.f32 %v252, %v303
  %v324 = vadd.f32 %v253, %v320
  %325 = vst [vmem:[%s2] sm:$0xff] %v323
  %326 = vst [vmem:[%s2 + $0x8] sm:$0xff] %v324
  // Predicated region
  $region10: #{layer_norm.1} parent=0 // pred_check
    _
  $region11: #{layer_norm.1} parent=0 // pred_check_branch
    %328 = sbr.rel (0) target = $region13
  $region12: #{layer_norm.1} parent=0 // pred_region
    _
  $region13: #{layer_norm.1} parent=0 // pred_fallthru
    _
  // Predicated region
  $region14: #{layer_norm.1} parent=0 // pred_check
    _
  $region15: #{layer_norm.1} parent=0 // pred_check_branch
    %330 = sbr.rel (0) target = $region17
  $region16: #{layer_norm.1} parent=0 // pred_region
    _
  $region17: #{layer_norm.1} parent=0 // pred_fallthru
    _

</llo_original>
